<compile_context>
chip_gen: v5e
topology: v5e:2x2
jax: 0.10.0
libtpu: 0.0.40
codegen_flags: <defaults>
</compile_context>

<pallas_src>
import functools
import math

import numpy as np

import jax
import jax.numpy as jnp
from jax.experimental import pallas as pl
from jax.experimental.pallas import tpu as pltpu

_LANE = 128


def _vmem_capacity_bytes():
    """Per-generation VMEM capacity; conservative fallback if unavailable."""
    try:
        info = pltpu.get_tpu_info()
        cap = getattr(info, "vmem_capacity_bytes", None)
        if cap:
            return int(cap)
    except Exception:
        pass
    return 64 * 1024 * 1024  # v7x per-TensorCore size (most conservative)


def _clamp_vmem(want, cap):
    return int(min(max(int(want), 32 * 1024 * 1024), int(cap)))


# ---------------------------------------------------------------------------
# Tiled path: lane-aligned L split into 128-multiple tiles with 128-lane halos.
# ---------------------------------------------------------------------------
def _conv_kernel_tiled(xp_ref, xc_ref, xn_ref, w_ref, b_ref, o_ref, *,
                       K, pad_left, lt, num_tiles):
    j = pl.program_id(0) % num_tiles            # tile index within the sequence
    cur = xc_ref[...]                           # (C_in_p, lt)
    ph = xp_ref[...]                            # (C_in_p, 128) prev-tile tail
    nh = xn_ref[...]                            # (C_in_p, 128) next-tile head

    # Hoisted boundary zeroing: sequence edges => zero "same" padding, applied
    # once on the 128-wide halo blocks instead of per-tap full-width selects.
    prev_h = jnp.where(j > 0, ph, jnp.zeros_like(ph))
    next_h = jnp.where(j < num_tiles - 1, nh, jnp.zeros_like(nh))
    col128 = jax.lax.broadcasted_iota(jnp.int32, prev_h.shape, 1)

    acc = None
    for t in range(K):
        s = t - pad_left                        # static tap shift
        if s == 0:
            win = cur
        elif s < 0:
            # win[:, c] = cur[:, c+s]; the first -s columns come from the prev
            # halo.  Only the leading 128-lane column needs halo/mask work.
            rc = pltpu.roll(cur, -s, 1)
            rp = pltpu.roll(prev_h, -s, 1)
            edge = jnp.where(col128 >= -s, rc[:, :_LANE], rp)
            win = edge if lt == _LANE else jnp.concatenate(
                [edge, rc[:, _LANE:]], axis=1)
        else:
            # win[:, c] = cur[:, c+s]; the last s columns come from the next
            # halo.  Only the trailing 128-lane column needs halo/mask work.
            rc = pltpu.roll(cur, lt - s, 1)
            rn = pltpu.roll(next_h, _LANE - s, 1)
            edge = jnp.where(col128 < _LANE - s, rc[:, lt - _LANE:], rn)
            win = edge if lt == _LANE else jnp.concatenate(
                [rc[:, :lt - _LANE], edge], axis=1)
        part = jnp.dot(w_ref[t], win, preferred_element_type=jnp.float32)
        acc = part if acc is None else acc + part
    o_ref[...] = (acc + b_ref[...]).astype(o_ref.dtype)


# ---------------------------------------------------------------------------
# Single-block paths (no halos): static-slice shifted windows.
# ---------------------------------------------------------------------------
def _shifted(x, s):
    """Window x shifted by s along lanes, zero-filled at the block edges."""
    c, w = x.shape
    if s == 0:
        return x
    if s >= w or -s >= w:
        return jnp.zeros_like(x)
    if s > 0:
        return jnp.concatenate([x[:, s:], jnp.zeros((c, s), x.dtype)], axis=1)
    return jnp.concatenate([jnp.zeros((c, -s), x.dtype), x[:, :w + s]], axis=1)


def _conv_kernel_block(x_ref, w_ref, b_ref, o_ref, *, K, pad_left):
    """One full-L block (a single batch element); per-tap MXU dots."""
    x = x_ref[...]                              # (C_in_p, L)
    acc = None
    for t in range(K):
        win = _shifted(x, t - pad_left)
        part = jnp.dot(w_ref[t], win, preferred_element_type=jnp.float32)
        acc = part if acc is None else acc + part
    o_ref[...] = (acc + b_ref[...]).astype(o_ref.dtype)


def _conv_kernel_packed(col_ref, x_ref, w_ref, b_ref, o_ref, *,
                        K, pad_left, l_elem):
    """Several batch elements packed lane-densely into one block.

    col_ref holds the element-local column index of every lane (built in the
    wrapper, so no in-kernel integer mod is needed); it masks cross-element
    reads so each element keeps its own zero "same" padding.
    """
    x = x_ref[...]                              # (C_in_p, W)
    col = col_ref[...]                          # (1, W) int32
    acc = None
    for t in range(K):
        s = t - pad_left
        win = _shifted(x, s)
        if s > 0:
            win = jnp.where(col < l_elem - s, win, jnp.zeros_like(win))
        elif s < 0:
            win = jnp.where(col >= -s, win, jnp.zeros_like(win))
        part = jnp.dot(w_ref[t], win, preferred_element_type=jnp.float32)
        acc = part if acc is None else acc + part
    o_ref[...] = (acc + b_ref[...]).astype(o_ref.dtype)


# ---------------------------------------------------------------------------
# Wrapper
# ---------------------------------------------------------------------------
def sampadding_conv1d(x, weight, bias=None, *, max_l_tile=2048,
                      compute_dtype=None):
    """Same-padding Conv1d matching SampaddingConv1D.forward.

    x: (N, C_in, L); weight: (C_out, C_in, K); bias: (C_out,) or None.
    Returns (N, C_out, L) in x's dtype.  compute_dtype=jnp.bfloat16 casts the
    operands (f32 accumulation is kept) — recommended on v6e/v7x only.
    """
    N, C_in, L = x.shape
    C_out, w_cin, K = weight.shape
    assert w_cin == C_in
    pad_left = (K - 1) // 2      # nn.ConstantPad1d(((K-1)//2, K//2)) semantics
    out_dtype = x.dtype
    max_l_tile = max(int(max_l_tile), _LANE)

    cdt = np.dtype(x.dtype) if compute_dtype is None else np.dtype(compute_dtype)
    in_bytes = cdt.itemsize
    out_bytes = np.dtype(out_dtype).itemsize
    sub = max(8, 32 // in_bytes)                 # sublanes: f32 -> 8, bf16 -> 16
    C_in_p = -(-C_in // sub) * sub

    xk = x.astype(cdt)
    wk = weight.astype(cdt)
    if C_in_p != C_in:                           # sublane-align the channel dim
        xk = jnp.pad(xk, ((0, 0), (0, C_in_p - C_in), (0, 0)))
        wk = jnp.pad(wk, ((0, 0), (0, C_in_p - C_in), (0, 0)))
    w3 = jnp.transpose(wk, (2, 0, 1))            # (K, C_out, C_in_p) tap-major
    if bias is None:
        b2 = jnp.zeros((C_out, 1), jnp.float32)
    else:
        b2 = jnp.asarray(bias, jnp.float32).reshape(C_out, 1)

    cap_bytes = _vmem_capacity_bytes()
    budget = max(int(cap_bytes * 0.55), 16 * 1024 * 1024)
    vmem_cap = max(int(cap_bytes * 3 // 4), 32 * 1024 * 1024)
    w_bytes = 2 * (K * C_out * C_in_p * in_bytes + C_out * 4)

    def tiled_bytes(lt):
        return (2 * C_in_p * (lt + 2 * _LANE) * in_bytes   # dbl-buffered x + halos
                + 2 * C_out * lt * out_bytes               # dbl-buffered output
                + w_bytes                                   # resident weight+bias
                + 3 * C_in_p * lt * in_bytes                # roll/edge/window temps
                + 2 * C_out * lt * 4)                       # f32 accumulator

    def flat_bytes(width):
        return (2 * C_in_p * width * in_bytes
                + 2 * C_out * width * out_bytes
                + w_bytes
                + 3 * C_in_p * width * in_bytes
                + 2 * C_out * width * 4
                + 2 * 4 * width)                            # element-column index

    # ---------------- Path B: halo-tiled, lane-aligned L ----------------
    if L % _LANE == 0 and (K - 1) <= _LANE:
        lt = None
        for ntiles in range(1, L // _LANE + 1):             # largest tile first
            if L % ntiles:
                continue
            cand = L // ntiles
            if cand % _LANE or cand > max_l_tile or tiled_bytes(cand) > budget:
                continue
            lt = cand
            break
        if lt is None:
            lt = _LANE                                       # over-budget: min tile
        if L // lt >= 2:
            nt = L // lt
            r = lt // _LANE
            nhb = L // _LANE
            kern = functools.partial(_conv_kernel_tiled, K=K, pad_left=pad_left,
                                     lt=lt, num_tiles=nt)
            in_specs = [
                # Left halo: last 128 cols of the previous tile (clamped at the
                # left edge; its contribution is zeroed in-kernel).
                pl.BlockSpec((pl.Squeezed(), C_in_p, _LANE),
                             lambda i: (i // nt, 0,
                                        jnp.maximum((i % nt) * r - 1, 0))),
                # Current lane-dense tile.
                pl.BlockSpec((pl.Squeezed(), C_in_p, lt),
                             lambda i: (i // nt, 0, i % nt)),
                # Right halo: first 128 cols of the next tile (clamped).
                pl.BlockSpec((pl.Squeezed(), C_in_p, _LANE),
                             lambda i: (i // nt, 0,
                                        jnp.minimum((i % nt + 1) * r, nhb - 1))),
                pl.BlockSpec((K, C_out, C_in_p), lambda i: (0, 0, 0)),  # weight
                pl.BlockSpec((C_out, 1), lambda i: (0, 0)),             # bias
            ]
            out_spec = pl.BlockSpec((pl.Squeezed(), C_out, lt),
                                    lambda i: (i // nt, 0, i % nt))
            return pl.pallas_call(
                kern,
                out_shape=jax.ShapeDtypeStruct((N, C_out, L), out_dtype),
                grid_spec=pltpu.PrefetchScalarGridSpec(
                    num_scalar_prefetch=0,
                    grid=(N * nt,),                 # single balanced parallel axis
                    in_specs=in_specs,
                    out_specs=out_spec),
                compiler_params=pltpu.CompilerParams(
                    dimension_semantics=("parallel",),
                    vmem_limit_bytes=_clamp_vmem(2 * tiled_bytes(lt), vmem_cap)),
            )(xk, xk, xk, w3, b2)

    # ---------- Path A2: lane-unaligned L, batch packed lane-densely ----------
    if L % _LANE != 0:
        n_unit = _LANE // math.gcd(L, _LANE)      # elements per 128-aligned unit
        unit_w = n_unit * L
        if flat_bytes(unit_w) <= budget:
            n_units_total = -(-N // n_unit)
            target_w = max(2048, unit_w)
            units_per_blk = n_units_total
            while units_per_blk > 1 and (units_per_blk * unit_w > target_w or
                                         flat_bytes(units_per_blk * unit_w) > budget):
                units_per_blk = (units_per_blk + 1) // 2
            num_groups = -(-n_units_total // units_per_blk)
            blk_w = units_per_blk * unit_w                  # multiple of 128
            w_total = num_groups * blk_w

            x_flat = jnp.transpose(xk, (1, 0, 2)).reshape(C_in_p, N * L)
            x_flat = jnp.pad(x_flat, ((0, 0), (0, w_total - N * L)))
            col = (jnp.arange(blk_w, dtype=jnp.int32) % L).reshape(1, blk_w)

            kern = functools.partial(_conv_kernel_packed, K=K,
                                     pad_left=pad_left, l_elem=L)
            out_flat = pl.pallas_call(
                kern,
                out_shape=jax.ShapeDtypeStruct((C_out, w_total), out_dtype),
                grid_spec=pltpu.PrefetchScalarGridSpec(
                    num_scalar_prefetch=0,
                    grid=(num_groups,),
                    in_specs=[
                        pl.BlockSpec((1, blk_w), lambda g: (0, 0)),
                        pl.BlockSpec((C_in_p, blk_w), lambda g: (0, g)),
                        pl.BlockSpec((K, C_out, C_in_p), lambda g: (0, 0, 0)),
                        pl.BlockSpec((C_out, 1), lambda g: (0, 0)),
                    ],
                    out_specs=pl.BlockSpec((C_out, blk_w), lambda g: (0, g))),
                compiler_params=pltpu.CompilerParams(
                    dimension_semantics=("parallel",),
                    vmem_limit_bytes=_clamp_vmem(2 * flat_bytes(blk_w), vmem_cap)),
            )(col, x_flat, w3, b2)
            out_flat = out_flat[:, :N * L].reshape(C_out, N, L)
            return jnp.transpose(out_flat, (1, 0, 2))

    # ---------- Path A1 fallback: one full-L block per batch element ----------
    kern = functools.partial(_conv_kernel_block, K=K, pad_left=pad_left)
    return pl.pallas_call(
        kern,
        out_shape=jax.ShapeDtypeStruct((N, C_out, L), out_dtype),
        grid_spec=pltpu.PrefetchScalarGridSpec(
            num_scalar_prefetch=0,
            grid=(N,),
            in_specs=[
                pl.BlockSpec((pl.Squeezed(), C_in_p, L), lambda n: (n, 0, 0)),
                pl.BlockSpec((K, C_out, C_in_p), lambda n: (0, 0, 0)),
                pl.BlockSpec((C_out, 1), lambda n: (0, 0)),
            ],
            out_specs=pl.BlockSpec((pl.Squeezed(), C_out, L),
                                   lambda n: (n, 0, 0))),
        compiler_params=pltpu.CompilerParams(
            dimension_semantics=("parallel",),
            vmem_limit_bytes=_clamp_vmem(2 * flat_bytes(L), vmem_cap)),
    )(xk, w3, b2)


def _reference(x, weight, bias=None):
    """lax reference with the module's asymmetric same padding."""
    K = weight.shape[2]
    pad_left, pad_right = (K - 1) // 2, K // 2
    out = jax.lax.conv_general_dilated(
        x, weight, window_strides=(1,), padding=[(pad_left, pad_right)],
        dimension_numbers=("NCH", "OIH", "NCH"))
    if bias is not None:
        out = out + bias[None, :, None]
    return out


if __name__ == "__main__":
    key = jax.random.PRNGKey(0)

    def make_inputs(k, n, c_in, c_out, l, ks):
        kx, kw, kb = jax.random.split(k, 3)
        bound = 1.0 / (c_in * ks) ** 0.5        # nn.Conv1d default init range
        x = jax.random.normal(kx, (n, c_in, l), jnp.float32)
        w = jax.random.uniform(kw, (c_out, c_in, ks), jnp.float32, -bound, bound)
        b = jax.random.uniform(kb, (c_out,), jnp.float32, -bound, bound)
        return x, w, b

    TOL = dict(atol=2e-3, rtol=2e-3)
    k1, k2, k3, k4, k5 = jax.random.split(key, 5)

    # 1) Module-spec small shapes (batch=2, in=4, out=8, L=16, K=3):
    #    lane-unaligned L -> batch-packed lane-dense path (C_in padded 4->8).
    x, w, b = make_inputs(k1, 2, 4, 8, 16, 3)
    out = jax.block_until_ready(sampadding_conv1d(x, w, b))
    assert out.shape == (2, 8, 16)
    assert jnp.allclose(out, _reference(x, w, b), **TOL)

    # 2) Lane-aligned L, odd K: halo-tiled path, lt=256, collapsed grid=(4,).
    x, w, b = make_inputs(k2, 2, 8, 16, 512, 5)
    out = jax.block_until_ready(sampadding_conv1d(x, w, b, max_l_tile=256))
    assert out.shape == (2, 16, 512)
    assert jnp.allclose(out, _reference(x, w, b), **TOL)

    # 3) Even K (asymmetric 3/4 padding), lt=128 tiles, grid=(4,).
    x, w, b = make_inputs(k3, 1, 16, 8, 512, 8)
    out = jax.block_until_ready(sampadding_conv1d(x, w, b, max_l_tile=128))
    assert out.shape == (1, 8, 512)
    assert jnp.allclose(out, _reference(x, w, b), **TOL)

    # 4) Aligned L that fits a single tile, no bias: per-element block path.
    x, w, _ = make_inputs(k4, 2, 4, 8, 128, 3)
    out = jax.block_until_ready(sampadding_conv1d(x, w, None))
    assert out.shape == (2, 8, 128)
    assert jnp.allclose(out, _reference(x, w, None), **TOL)

    # 5) bf16 operands (f32 accumulation), compared against a bf16-rounded
    #    reference (this mode is intended for v6e/v7x; keep f32 on v5e).
    x, w, b = make_inputs(k5, 2, 8, 16, 512, 5)
    out = jax.block_until_ready(
        sampadding_conv1d(x, w, b, max_l_tile=256, compute_dtype=jnp.bfloat16))
    ref = _reference(x.astype(jnp.bfloat16).astype(jnp.float32),
                     w.astype(jnp.bfloat16).astype(jnp.float32), b)
    assert out.shape == (2, 16, 512)
    assert jnp.allclose(out, ref, atol=1e-2, rtol=1e-2)

    # TODO(synk): the PyTorch module's forward/backward hooks (Grad-CAM
    # feature/gradient capture) and X.requires_grad are framework-side
    # bookkeeping with no kernel equivalent; only the forward conv math is
    # implemented here.
    print("KERNEL_OK")
</pallas_src>

<mosaic_0001>
module attributes {stable_mosaic.version = 11 : i64} {
  func.func @_conv_kernel_packed(%arg0: i32, %arg1: memref<1x128xi32, #tpu.memory_space<vmem>>, %arg2: memref<8x128xf32, #tpu.memory_space<vmem>>, %arg3: memref<3x8x8xf32, #tpu.memory_space<vmem>>, %arg4: memref<8x1xf32, #tpu.memory_space<vmem>>, %arg5: memref<8x128xf32, #tpu.memory_space<vmem>>) attributes {dimension_semantics = [#tpu.dimension_semantics<parallel>], iteration_bounds = array<i64: 1>, scalar_prefetch = 0 : i64, scratch_operands = 0 : i64, tpu.core_type = #tpu.core_type<tc>, window_params = [{pipeline_mode = #tpu.pipeline_mode<synchronous>, transform_indices = @transform_0, window_bounds = array<i64: 1, 128>}, {transform_indices = @transform_1, window_bounds = array<i64: 8, 128>}, {pipeline_mode = #tpu.pipeline_mode<synchronous>, transform_indices = @transform_2, window_bounds = array<i64: 3, 8, 8>}, {pipeline_mode = #tpu.pipeline_mode<synchronous>, transform_indices = @transform_3, window_bounds = array<i64: 8, 1>}, {transform_indices = @transform_4, window_bounds = array<i64: 8, 128>}]} {
    %c0 = arith.constant 0 : index
    %c0_0 = arith.constant 0 : index
    %0 = vector.load %arg2[%c0, %c0_0] : memref<8x128xf32, #tpu.memory_space<vmem>>, vector<8x128xf32>
    %c0_1 = arith.constant 0 : index
    %c0_2 = arith.constant 0 : index
    %1 = vector.load %arg1[%c0_1, %c0_2] : memref<1x128xi32, #tpu.memory_space<vmem>>, vector<1x128xi32>
    %cst = arith.constant 0.000000e+00 : f32
    %2 = vector.broadcast %cst : f32 to vector<8x1xf32>
    %3 = vector.extract_strided_slice %0 {offsets = [0, 0], sizes = [8, 127], strides = [1, 1]} : vector<8x128xf32> to vector<8x127xf32>
    %4 = tpu.concatenate %2, %3 in 1 : vector<8x1xf32>, vector<8x127xf32> -> vector<8x128xf32>
    %c1_i32 = arith.constant 1 : i32
    %5 = vector.broadcast %c1_i32 : i32 to vector<1x128xi32>
    %6 = arith.cmpi sge, %1, %5 : vector<1x128xi32>
    %cst_3 = arith.constant 0.000000e+00 : f32
    %7 = vector.broadcast %cst_3 : f32 to vector<8x128xf32>
    %8 = vector.shape_cast %6 : vector<1x128xi1> to vector<1x128xi1>
    %9 = vector.broadcast %8 : vector<1x128xi1> to vector<8x128xi1>
    %10 = arith.select %9, %4, %7 : vector<8x128xi1>, vector<8x128xf32>
    %c0_4 = arith.constant 0 : index
    %c0_5 = arith.constant 0 : index
    %c0_6 = arith.constant 0 : index
    %11 = vector.load %arg3[%c0_4, %c0_5, %c0_6] : memref<3x8x8xf32, #tpu.memory_space<vmem>>, vector<1x8x8xf32>
    %12 = vector.shape_cast %11 : vector<1x8x8xf32> to vector<8x8xf32>
    %cst_7 = arith.constant dense<0.000000e+00> : vector<8x128xf32>
    %13 = tpu.matmul %12, %10, %cst_7 {dimension_numbers = #tpu.dot_dimension_numbers<[1], [0], [0], [1], [0, 0, 1, 1], [], []>} : vector<8x8xf32>, vector<8x128xf32>, vector<8x128xf32> -> vector<8x128xf32>
    %c1 = arith.constant 1 : index
    %c0_8 = arith.constant 0 : index
    %c0_9 = arith.constant 0 : index
    %14 = vector.load %arg3[%c1, %c0_8, %c0_9] : memref<3x8x8xf32, #tpu.memory_space<vmem>>, vector<1x8x8xf32>
    %15 = vector.shape_cast %14 : vector<1x8x8xf32> to vector<8x8xf32>
    %cst_10 = arith.constant dense<0.000000e+00> : vector<8x128xf32>
    %16 = tpu.matmul %15, %0, %cst_10 {dimension_numbers = #tpu.dot_dimension_numbers<[1], [0], [0], [1], [0, 0, 1, 1], [], []>} : vector<8x8xf32>, vector<8x128xf32>, vector<8x128xf32> -> vector<8x128xf32>
    %17 = arith.addf %13, %16 : vector<8x128xf32>
    %18 = vector.extract_strided_slice %0 {offsets = [0, 1], sizes = [8, 127], strides = [1, 1]} : vector<8x128xf32> to vector<8x127xf32>
    %cst_11 = arith.constant 0.000000e+00 : f32
    %19 = vector.broadcast %cst_11 : f32 to vector<8x1xf32>
    %20 = tpu.concatenate %18, %19 in 1 : vector<8x127xf32>, vector<8x1xf32> -> vector<8x128xf32>
    %c15_i32 = arith.constant 15 : i32
    %21 = vector.broadcast %c15_i32 : i32 to vector<1x128xi32>
    %22 = arith.cmpi slt, %1, %21 : vector<1x128xi32>
    %cst_12 = arith.constant 0.000000e+00 : f32
    %23 = vector.broadcast %cst_12 : f32 to vector<8x128xf32>
    %24 = vector.shape_cast %22 : vector<1x128xi1> to vector<1x128xi1>
    %25 = vector.broadcast %24 : vector<1x128xi1> to vector<8x128xi1>
    %26 = arith.select %25, %20, %23 : vector<8x128xi1>, vector<8x128xf32>
    %c2 = arith.constant 2 : index
    %c0_13 = arith.constant 0 : index
    %c0_14 = arith.constant 0 : index
    %27 = vector.load %arg3[%c2, %c0_13, %c0_14] : memref<3x8x8xf32, #tpu.memory_space<vmem>>, vector<1x8x8xf32>
    %28 = vector.shape_cast %27 : vector<1x8x8xf32> to vector<8x8xf32>
    %cst_15 = arith.constant dense<0.000000e+00> : vector<8x128xf32>
    %29 = tpu.matmul %28, %26, %cst_15 {dimension_numbers = #tpu.dot_dimension_numbers<[1], [0], [0], [1], [0, 0, 1, 1], [], []>} : vector<8x8xf32>, vector<8x128xf32>, vector<8x128xf32> -> vector<8x128xf32>
    %30 = arith.addf %17, %29 : vector<8x128xf32>
    %c0_16 = arith.constant 0 : index
    %c0_17 = arith.constant 0 : index
    %31 = vector.load %arg4[%c0_16, %c0_17] : memref<8x1xf32, #tpu.memory_space<vmem>>, vector<8x1xf32>
    %32 = vector.broadcast %31 : vector<8x1xf32> to vector<8x128xf32>
    %33 = arith.addf %30, %32 : vector<8x128xf32>
    %c0_18 = arith.constant 0 : index
    %c0_19 = arith.constant 0 : index
    %34 = vector.load %arg5[%c0_18, %c0_19] : memref<8x128xf32, #tpu.memory_space<vmem>>, vector<8x128xf32>
    tpu.vector_store %arg5[%c0_18, %c0_19], %33 {strides = array<i32>} : memref<8x128xf32, #tpu.memory_space<vmem>>, vector<8x128xf32>,
    return
  }
  func.func @transform_0(%arg0: i32) -> (i32, i32) {
    %c0_i32 = arith.constant 0 : i32
    %c0_i32_0 = arith.constant 0 : i32
    %c0_i32_1 = arith.constant 0 : i32
    return %c0_i32, %c0_i32_0 : i32, i32
  }
  func.func @transform_1(%arg0: i32) -> (i32, i32) {
    %c0_i32 = arith.constant 0 : i32
    %c0_i32_0 = arith.constant 0 : i32
    return %c0_i32, %arg0 : i32, i32
  }
  func.func @transform_2(%arg0: i32) -> (i32, i32, i32) {
    %c0_i32 = arith.constant 0 : i32
    %c0_i32_0 = arith.constant 0 : i32
    %c0_i32_1 = arith.constant 0 : i32
    %c0_i32_2 = arith.constant 0 : i32
    return %c0_i32, %c0_i32_0, %c0_i32_1 : i32, i32, i32
  }
  func.func @transform_3(%arg0: i32) -> (i32, i32) {
    %c0_i32 = arith.constant 0 : i32
    %c0_i32_0 = arith.constant 0 : i32
    %c0_i32_1 = arith.constant 0 : i32
    return %c0_i32, %c0_i32_0 : i32, i32
  }
  func.func @transform_4(%arg0: i32) -> (i32, i32) {
    %c0_i32 = arith.constant 0 : i32
    %c0_i32_0 = arith.constant 0 : i32
    return %c0_i32, %arg0 : i32, i32
  }
}

</mosaic_0001>

<llo_original>
// kernel: tpu_custom_call.1
$region0: #{tpu_custom_call.1}
  #allocation0 [shape = 'u32[]', space=smem, size = 0x4, offset = 0x4, fixed_abs, tag = 'smem constant byte address 0x4 - core index']
  #allocation1 [shape = 'u32[72,128]{1,0:T(1,128)}', space=vmem, size = 0x9000, scoped, tag = 'internal scratch']
  %s0 = inlined_call_operand.vmem [shape: s32[1,128], index: 0, kind: input, shape index: {}]
  %s1 = inlined_call_operand.vmem [shape: f32[8,128], index: 1, kind: input, shape index: {}]
  %s2 = inlined_call_operand.hbm [shape: f32[3,8,8], index: 2, kind: input, shape index: {}]
  %s3 = inlined_call_operand.vmem [shape: f32[8,1], index: 3, kind: input, shape index: {}]
  %s4 = inlined_call_operand.hbm [shape: f32[8,128], index: 4, kind: output, shape index: {}]
  %s5 = sld [smem:[#allocation0]]
  $region30: #{tpu_custom_call.1} parent=0
    _
  %s7 = ssub.s32 1, %s5
  %s8 = scalar_select 0, %s7, %s5
  $region1: #{tpu_custom_call.1} parent=0
    #allocation2 [shape = 'u8[12288]{0}', space=vmem, size = 0x3000, scoped, tag = 'input window, operand 2, single buffered']
    #allocation3 [shape = 's32[1]{0}', space=sflag, size = 0x4, scoped, tag = 'scoped memory for tpu_custom_call.1']
    #allocation4 [shape = 's32[1]{0}', space=sflag, size = 0x4, scoped, tag = 'scoped memory for tpu_custom_call.1']
    #allocation5 [shape = 'u8[4096]{0}', space=vmem, size = 0x1000, scoped, tag = 'output window, operand 0, single buffered']
    %9 = vsyncpa [#allocation3], 0
    %10 = vsyncpa [#allocation4], 0
    // Predicated region
    $region2: #{tpu_custom_call.1} parent=1 // pred_check
      _
    $region3: #{tpu_custom_call.1} parent=1 // pred_check_branch
      %12 = sbr.rel (0) target = $region5
    $region4: #{tpu_custom_call.1} parent=1 // pred_region
      _
    $region5: #{tpu_custom_call.1} parent=1 // pred_fallthru
      _
    // Predicated region
    $region6: #{tpu_custom_call.1} parent=1 // pred_check
      _
    $region7: #{tpu_custom_call.1} parent=1 // pred_check_branch
      %14 = sbr.rel (0) target = $region9
    $region8: #{tpu_custom_call.1} parent=1 // pred_region
      _
    $region9: #{tpu_custom_call.1} parent=1 // pred_fallthru
      _
    // Predicated region
    $region10: #{tpu_custom_call.1} parent=1 // pred_check
      _
    $region11: #{tpu_custom_call.1} parent=1 // pred_check_branch
      %16 = sbr.rel (0) target = $region13
    $region12: #{tpu_custom_call.1} parent=1 // pred_region
      %18 = vsyncadd [#allocation3], 0
      %s19 = sshll.u32 %s2, 4
      %s20 = int_to_ptr.hbm [resolvable:$true] %s19
      %s21 = sshll.u32 [#allocation2], 4
      %s22 = int_to_ptr.vmem [resolvable:$true] %s21
      %27 = dma.hbm_to_vmem [thread:$0]  %s20, 384, %s22, [#allocation3], 128, 128, 8
    $region13: #{tpu_custom_call.1} parent=1 // pred_fallthru
      _
    // Predicated region
    $region14: #{tpu_custom_call.1} parent=1 // pred_check
      _
    $region15: #{tpu_custom_call.1} parent=1 // pred_check_branch
      %29 = sbr.rel (0) target = $region17
    $region16: #{tpu_custom_call.1} parent=1 // pred_region
      _
    $region17: #{tpu_custom_call.1} parent=1 // pred_fallthru
      _
    // Predicated region
    $region18: #{tpu_custom_call.1} parent=1 // pred_check
      _
    $region19: #{tpu_custom_call.1} parent=1 // pred_check_branch
      %31 = sbr.rel (0) target = $region21
    $region20: #{tpu_custom_call.1} parent=1 // pred_region
      %33 = dma.done [#allocation3], 384
    $region21: #{tpu_custom_call.1} parent=1 // pred_fallthru
      _
    %v34 = vld [vmem:[%s1] sm:$0xff]
    %v35 = vld [vmem:[%s0] sm:$0x1]
    %37 = vrot.lane.b32.xlu0 %v34, 1
    %v38 = vpop.permute.xlu0 %37
    %vm40 = vcmask 7168
    %v41 = vsel %vm40, 0.0, %v38
    %vm42 = vcmp.ge.s32.totalorder %v35, 1
    %v43 = vsel %vm42, 1, 0
    %v44 = vperm.slane %v43, 0
    %vm45 = vcmp.eq.s32.totalorder %v44, 1
    %v46 = vsel %vm45, %v41, 0.0
    %v47 = vld [vmem:[#allocation2] sm:$0xff]
    %s48 = scalar_lea.vmem [#allocation2], 8
    %v49 = vld [vmem:[%s48] sm:$0xff]
    %vm50 = vcmask 64512
    %v52 = vsel %vm50, %v49, 0
    %54 = vmatpush.msra.mxu0 0.0
    %55 = vmatpush.msra.mxu0 0.0
    %56 = vmatpush.msra.mxu0 0.0
    %57 = vmatpush.msra.mxu0 0.0
    %58 = vmatpush.msra.mxu0 0.0
    %59 = vmatpush.msra.mxu0 0.0
    %60 = vmatpush.msra.mxu0 0.0
    %61 = vmatpush.msra.mxu0 0.0
    %62 = vmatpush.msra.mxu0 0.0
    %63 = vmatpush.msra.mxu0 0.0
    %64 = vmatpush.msra.mxu0 0.0
    %65 = vmatpush.msra.mxu0 0.0
    %66 = vmatpush.msra.mxu0 0.0
    %67 = vmatpush.msra.mxu0 0.0
    %68 = vmatpush.msra.mxu0 0.0
    %69 = vmatpush.msra.mxu0 %v34
    %70 = vmatmul.f32.gmra.mxu0 %v52
    %v71 = vpop.f32.mrf.mxu0
    %v72 = vadd.f32 0.0, %v71
    %73 = vdwg.mxu0
    %v75 = vsel %vm50, %v47, 0
    %77 = vmatpush.msra.mxu0 0.0
    %78 = vmatpush.msra.mxu0 0.0
    %79 = vmatpush.msra.mxu0 0.0
    %80 = vmatpush.msra.mxu0 0.0
    %81 = vmatpush.msra.mxu0 0.0
    %82 = vmatpush.msra.mxu0 0.0
    %83 = vmatpush.msra.mxu0 0.0
    %84 = vmatpush.msra.mxu0 0.0
    %85 = vmatpush.msra.mxu0 0.0
    %86 = vmatpush.msra.mxu0 0.0
    %87 = vmatpush.msra.mxu0 0.0
    %88 = vmatpush.msra.mxu0 0.0
    %89 = vmatpush.msra.mxu0 0.0
    %90 = vmatpush.msra.mxu0 0.0
    %91 = vmatpush.msra.mxu0 0.0
    %92 = vmatpush.msra.mxu0 %v46
    %93 = vmatmul.f32.gmra.mxu0 %v75
    %v94 = vpop.f32.mrf.mxu0
    %v95 = vadd.f32 %v72, %v94
    %96 = vdwg.mxu0
    %97 = vrot.lane.b32.xlu0 %v34, 127
    %v98 = vpop.permute.xlu0 %97
    %vm100 = vcmask 1039360
    %v101 = vsel %vm100, %v98, 0.0
    %vm102 = vcmp.lt.s32.totalorder %v35, 15
    %v103 = vsel %vm102, 1, 0
    %v104 = vperm.slane %v103, 0
    %vm105 = vcmp.eq.s32.totalorder %v104, 1
    %v106 = vsel %vm105, %v101, 0.0
    %s107 = scalar_lea.vmem [#allocation2], 16
    %v108 = vld [vmem:[%s107] sm:$0xff]
    %v110 = vsel %vm50, %v108, 0
    %112 = vmatpush.msra.mxu0 0.0
    %113 = vmatpush.msra.mxu0 0.0
    %114 = vmatpush.msra.mxu0 0.0
    %115 = vmatpush.msra.mxu0 0.0
    %116 = vmatpush.msra.mxu0 0.0
    %117 = vmatpush.msra.mxu0 0.0
    %118 = vmatpush.msra.mxu0 0.0
    %119 = vmatpush.msra.mxu0 0.0
    %120 = vmatpush.msra.mxu0 0.0
    %121 = vmatpush.msra.mxu0 0.0
    %122 = vmatpush.msra.mxu0 0.0
    %123 = vmatpush.msra.mxu0 0.0
    %124 = vmatpush.msra.mxu0 0.0
    %125 = vmatpush.msra.mxu0 0.0
    %126 = vmatpush.msra.mxu0 0.0
    %127 = vmatpush.msra.mxu0 %v106
    %128 = vmatmul.f32.gmra.mxu0 %v110
    %v129 = vpop.f32.mrf.mxu0
    %v130 = vadd.f32 0.0, %v129
    %131 = vdwg.mxu0
    %v132 = vadd.f32 %v95, %v130
    %v133 = vld [vmem:[%s3] sm:$0xff]
    %135 = vset.pattern.permute.xlu0 0
    %136 = vperm.xlu0 %135, %v133
    %v137 = vpop.permute.xlu0 %136
    %v139 = vadd.f32 %v132, %v137
    %140 = vst [vmem:[#allocation5] sm:$0xff] %v139
    // Predicated region
    $region22: #{tpu_custom_call.1} parent=1 // pred_check
      _
    $region23: #{tpu_custom_call.1} parent=1 // pred_check_branch
      %142 = sbr.rel (0) target = $region25
    $region24: #{tpu_custom_call.1} parent=1 // pred_region
      %144 = vsyncadd [#allocation4], 0
      %s146 = sshll.u32 [#allocation5], 4
      %s147 = int_to_ptr.vmem [resolvable:$true] %s146
      %s148 = sshll.u32 %s4, 4
      %s149 = int_to_ptr.hbm [resolvable:$true] %s148
      %151 = dma.vmem_to_hbm [thread:$0]  %s147, 128, %s149, [#allocation4]
    $region25: #{tpu_custom_call.1} parent=1 // pred_fallthru
      _
    // Predicated region
    $region26: #{tpu_custom_call.1} parent=1 // pred_check
      _
    $region27: #{tpu_custom_call.1} parent=1 // pred_check_branch
      %153 = sbr.rel (0) target = $region29
    $region28: #{tpu_custom_call.1} parent=1 // pred_region
      %155 = dma.done [#allocation4], 128
    $region29: #{tpu_custom_call.1} parent=1 // pred_fallthru
      _
    %156 = vsyncpa [#allocation3], 1
    %157 = vsyncpa [#allocation4], 1

</llo_original>
